<compile_context>
chip_gen: v6e
topology: v6e:2x2x1
jax: 0.10.0
libtpu: 0.0.40
codegen_flags: <defaults>
</compile_context>

<pallas_src>
import functools

import jax
import jax.numpy as jnp
from jax.experimental import pallas as pl
from jax.experimental.pallas import tpu as pltpu

EPS = 1e-5    # PyTorch InstanceNorm1d default
K = 3         # conv kernel size (reflection pad = 1)


def _round_up(x, m):
    return (x + m - 1) // m * m


@functools.cache
def _roll_shift1_gives_prev() -> bool:
    """True iff pltpu.roll(x, 1, axis=-1)[..., l] == x[..., l-1] (jnp.roll
    convention).  One tiny cached probe keeps the fused-tap construction
    correct regardless of the rotate-direction convention."""
    def probe(x_ref, o_ref):
        o_ref[...] = pltpu.roll(x_ref[...], 1, axis=1)

    x = jnp.arange(8 * 128, dtype=jnp.float32).reshape(8, 128)
    y = pl.pallas_call(
        probe, out_shape=jax.ShapeDtypeStruct((8, 128), jnp.float32))(x)
    return bool(y[0, 0] == x[0, 127])


def _conv1d_k3(a, w, b, roll_gives_prev):
    """Fused reflection-pad + 3-tap conv.

    a: (NB, Cp, L) f32 activations
    w: (Cp, 3*Cp) mxu-dtype, columns ordered [tap0 | tap1 | tap2]
    b: (1, Cp, 1) f32 bias
    """
    nb, cp, L = a.shape
    r1 = pltpu.roll(a, 1, axis=2)        # x[l-1] under jnp.roll convention
    r2 = pltpu.roll(a, L - 1, axis=2)    # x[l+1] under jnp.roll convention
    prev_c, next_c = (r1, r2) if roll_gives_prev else (r2, r1)

    lane = jax.lax.broadcasted_iota(jnp.int32, a.shape, 2)
    # ReflectionPad1d(1): tap0 at l=0 is x[1]; tap2 at l=L-1 is x[L-2] -- which
    # is exactly what the *other* rotation holds at that lane.
    left = jnp.where(lane == 0, next_c, prev_c)        # x[l-1], reflected at 0
    right = jnp.where(lane == L - 1, prev_c, next_c)   # x[l+1], reflected at L-1

    stacked = jnp.concatenate([left, a, right], axis=1).astype(w.dtype)  # (NB, 3Cp, L)
    wb = jnp.broadcast_to(w[None], (nb,) + w.shape)                      # (NB, Cp, 3Cp)
    y = jnp.einsum("ncf,nfl->ncl", wb, stacked,
                   preferred_element_type=jnp.float32)
    return y + b


def _instance_norm(a, g, b):
    """Affine InstanceNorm over the length axis, single-pass statistics
    (biased variance, eps inside the rsqrt — PyTorch semantics)."""
    inv_l = 1.0 / a.shape[-1]
    mean = jnp.sum(a, axis=-1, keepdims=True) * inv_l
    ex2 = jnp.sum(a * a, axis=-1, keepdims=True) * inv_l
    var = jnp.maximum(ex2 - mean * mean, 0.0)
    return (a - mean) * jax.lax.rsqrt(var + EPS) * g + b


def _residual_block_kernel(x_ref, w1_ref, w2_ref, vec_ref, o_ref, *,
                           roll_gives_prev):
    x = x_ref[...].astype(jnp.float32)       # (NB, Cp, L)
    vecs = vec_ref[...]                      # (Cp, 8): [b1 g1 be1 b2 g2 be2 0 0]

    def col(j):
        return vecs[:, j:j + 1][None]        # (1, Cp, 1), broadcasts over (NB, Cp, L)

    b1, g1, be1, b2, g2, be2 = (col(j) for j in range(6))

    h = _conv1d_k3(x, w1_ref[...], b1, roll_gives_prev)
    h = _instance_norm(h, g1, be1)
    h = jnp.maximum(h, 0.0)                  # ReLU
    h = _conv1d_k3(h, w2_ref[...], b2, roll_gives_prev)
    h = _instance_norm(h, g2, be2)

    o_ref[...] = (h + x).astype(o_ref.dtype)


def residual_block(x, params, *, nb=None, mxu_dtype=jnp.bfloat16):
    """x: (N, C, L) float32.  params: w1,b1,g1,be1,w2,b2,g2,be2 (PyTorch layouts).

    mxu_dtype: dtype of the matmul operands (bf16 recommended on v5e/v6e/v7x;
    accumulation is always f32).  Use jnp.float32 for bit-faithful arithmetic.
    """
    N, C, L = x.shape
    assert L >= 2, "ReflectionPad1d(1) requires L >= 2"

    cp = _round_up(C, 8)                     # sublane-aligned channel count

    if nb is None:
        # Samples per grid step: amortize the ~0.35us/step pipeline overhead
        # while staying well inside VMEM on every generation (v7x: 64 MiB).
        per_sample = cp * L * 4 * 16         # rough f32 working set per sample
        nb = int(max(1, min(N, (8 * 1024 * 1024) // per_sample, 64)))
    npad = _round_up(N, nb)

    xp = jnp.zeros((npad, cp, L), x.dtype).at[:N, :C, :].set(x)

    def prep_w(w):                           # (C_out, C_in, K) -> (Cp, 3*Cp)
        wp = jnp.zeros((cp, cp, K), jnp.float32).at[:C, :C, :].set(w)
        return jnp.concatenate([wp[:, :, 0], wp[:, :, 1], wp[:, :, 2]],
                               axis=1).astype(mxu_dtype)

    def prep_v(v):
        return jnp.zeros((cp,), jnp.float32).at[:C].set(v)

    w1 = prep_w(params["w1"])
    w2 = prep_w(params["w2"])
    vecs = jnp.stack([prep_v(params["b1"]), prep_v(params["g1"]),
                      prep_v(params["be1"]), prep_v(params["b2"]),
                      prep_v(params["g2"]), prep_v(params["be2"]),
                      jnp.zeros((cp,), jnp.float32),
                      jnp.zeros((cp,), jnp.float32)], axis=1)   # (Cp, 8)

    x_spec = pl.BlockSpec((nb, cp, L), lambda i: (i, 0, 0))
    w_spec = pl.BlockSpec((cp, 3 * cp), lambda i: (0, 0))
    v_spec = pl.BlockSpec((cp, 8), lambda i: (0, 0))

    kernel = functools.partial(_residual_block_kernel,
                               roll_gives_prev=_roll_shift1_gives_prev())

    out = pl.pallas_call(
        kernel,
        out_shape=jax.ShapeDtypeStruct((npad, cp, L), x.dtype),
        grid_spec=pltpu.PrefetchScalarGridSpec(
            num_scalar_prefetch=0,
            grid=(npad // nb,),
            in_specs=[x_spec, w_spec, w_spec, v_spec],
            out_specs=x_spec,
        ),
        compiler_params=pltpu.CompilerParams(
            dimension_semantics=("parallel",),
            vmem_limit_bytes=48 * 1024 * 1024,
        ),
    )(xp, w1, w2, vecs)

    return out[:N, :C, :]


def _reference(x, params, mxu_dtype=jnp.float32):
    """Pure-JAX reference of the PyTorch forward.  mxu_dtype optionally mimics
    the kernel's matmul-operand precision (accumulation is f32 either way)."""
    def conv(a, w, b):
        L = a.shape[-1]
        ap = jnp.concatenate([a[:, :, 1:2], a, a[:, :, L - 2:L - 1]], axis=-1)
        out = jnp.zeros(a.shape, jnp.float32)
        for k in range(K):
            out = out + jnp.einsum(
                "oc,ncl->nol",
                w[:, :, k].astype(mxu_dtype),
                ap[:, :, k:k + L].astype(mxu_dtype),
                preferred_element_type=jnp.float32)
        return out + b[None, :, None]

    def inorm(a, g, be):
        mean = jnp.mean(a, axis=-1, keepdims=True)
        var = jnp.mean((a - mean) ** 2, axis=-1, keepdims=True)
        return (a - mean) / jnp.sqrt(var + EPS) * g[None, :, None] + be[None, :, None]

    h = jax.nn.relu(inorm(conv(x, params["w1"], params["b1"]),
                          params["g1"], params["be1"]))
    h = inorm(conv(h, params["w2"], params["b2"]), params["g2"], params["be2"])
    return h + x


if __name__ == "__main__":
    N, C, L = 2, 4, 16
    key = jax.random.PRNGKey(0)
    ks = jax.random.split(key, 9)

    x = jax.random.normal(ks[0], (N, C, L), jnp.float32)

    scale = 1.0 / (C * K) ** 0.5  # roughly PyTorch conv init scale
    params = dict(
        w1=jax.random.uniform(ks[1], (C, C, K), jnp.float32, -scale, scale),
        b1=jax.random.uniform(ks[2], (C,), jnp.float32, -scale, scale),
        g1=1.0 + 0.1 * jax.random.normal(ks[3], (C,), jnp.float32),
        be1=0.1 * jax.random.normal(ks[4], (C,), jnp.float32),
        w2=jax.random.uniform(ks[5], (C, C, K), jnp.float32, -scale, scale),
        b2=jax.random.uniform(ks[6], (C,), jnp.float32, -scale, scale),
        g2=1.0 + 0.1 * jax.random.normal(ks[7], (C,), jnp.float32),
        be2=0.1 * jax.random.normal(ks[8], (C,), jnp.float32),
    )

    # 1) Exact-semantics path (f32 MXU operands) vs. the pure-f32 reference.
    out_f32 = residual_block(x, params, mxu_dtype=jnp.float32)
    jax.block_until_ready(out_f32)
    ref_f32 = _reference(x, params, mxu_dtype=jnp.float32)
    assert out_f32.shape == (N, C, L)
    assert jnp.allclose(out_f32, ref_f32, atol=1e-4, rtol=1e-4), \
        float(jnp.max(jnp.abs(out_f32 - ref_f32)))

    # 2) Default mixed-precision path (bf16 MXU operands, f32 accumulation)
    #    vs. a reference applying the same operand rounding.
    out_bf16 = residual_block(x, params)
    jax.block_until_ready(out_bf16)
    ref_bf16 = _reference(x, params, mxu_dtype=jnp.bfloat16)
    assert jnp.allclose(out_bf16, ref_bf16, atol=1e-2, rtol=1e-2), \
        float(jnp.max(jnp.abs(out_bf16 - ref_bf16)))

    print("KERNEL_OK")
</pallas_src>

<mosaic_0001>
module attributes {stable_mosaic.version = 11 : i64} {
  func.func @probe(%arg0: memref<8x128xf32, #tpu.memory_space<vmem>>, %arg1: memref<8x128xf32, #tpu.memory_space<vmem>>) attributes {dimension_semantics = [], scalar_prefetch = 0 : i64, scratch_operands = 0 : i64, tpu.core_type = #tpu.core_type<tc>} {
    %c0 = arith.constant 0 : index
    %c0_0 = arith.constant 0 : index
    %0 = vector.load %arg0[%c0, %c0_0] : memref<8x128xf32, #tpu.memory_space<vmem>>, vector<8x128xf32>
    %c1_i32 = arith.constant 1 : i32
    %1 = tpu.dynamic_rotate %0 by %c1_i32 dim 1 : vector<8x128xf32>, i32 -> vector<8x128xf32>
    %c0_1 = arith.constant 0 : index
    %c0_2 = arith.constant 0 : index
    %2 = vector.load %arg1[%c0_1, %c0_2] : memref<8x128xf32, #tpu.memory_space<vmem>>, vector<8x128xf32>
    tpu.vector_store %arg1[%c0_1, %c0_2], %1 {strides = array<i32>} : memref<8x128xf32, #tpu.memory_space<vmem>>, vector<8x128xf32>,
    return
  }
}

</mosaic_0001>

<llo_original>
// kernel: tpu_custom_call.1
$region0: #{tpu_custom_call.1}
  #allocation0 [shape = 'u32[]', space=smem, size = 0x4, offset = 0x4, fixed_abs, tag = 'smem constant byte address 0x4 - core index']
  #allocation1 [shape = 'u32[144,128]{1,0:T(1,128)}', space=vmem, size = 0x12000, scoped, tag = 'internal scratch']
  %s0 = inlined_call_operand.hbm [shape: f32[8,128], index: 0, kind: input, shape index: {}]
  %s1 = inlined_call_operand.hbm [shape: f32[8,128], index: 1, kind: output, shape index: {}]
  %s2 = sld [smem:[#allocation0]]
  $region18: #{tpu_custom_call.1} parent=0
    _
  %s4 = ssub.s32 1, %s2
  %s5 = scalar_select 0, %s4, %s2
  $region1: #{tpu_custom_call.1} parent=0
    #allocation2 [shape = 'u8[4096]{0}', space=vmem, size = 0x1000, scoped, tag = 'input window, operand 0, single buffered']
    #allocation3 [shape = 's32[1]{0}', space=sflag, size = 0x4, scoped, tag = 'scoped memory for tpu_custom_call.1']
    #allocation4 [shape = 's32[1]{0}', space=sflag, size = 0x4, scoped, tag = 'scoped memory for tpu_custom_call.1']
    #allocation5 [shape = 'u8[4096]{0}', space=vmem, size = 0x1000, scoped, tag = 'output window, operand 0, single buffered']
    %6 = vsyncpa [#allocation3], 0
    %7 = vsyncpa [#allocation4], 0
    // Predicated region
    $region2: #{tpu_custom_call.1} parent=1 // pred_check
      _
    $region3: #{tpu_custom_call.1} parent=1 // pred_check_branch
      %9 = sbr.rel (0) target = $region5
    $region4: #{tpu_custom_call.1} parent=1 // pred_region
      %s11 = ssub.s32 128, 128
      %12 = vsyncadd [#allocation3], %s11
      %s14 = sshll.u32 [#allocation2], 4
      %s15 = int_to_ptr.vmem [resolvable:$true] %s14
      %17 = dma.hbm_to_vmem [thread:$0]  %s0, 128, %s15, [#allocation3]
    $region5: #{tpu_custom_call.1} parent=1 // pred_fallthru
      _
    // Predicated region
    $region6: #{tpu_custom_call.1} parent=1 // pred_check
      _
    $region7: #{tpu_custom_call.1} parent=1 // pred_check_branch
      %19 = sbr.rel (0) target = $region9
    $region8: #{tpu_custom_call.1} parent=1 // pred_region
      %20 = dma.done [#allocation3], 128
    $region9: #{tpu_custom_call.1} parent=1 // pred_fallthru
      _
    %v21 = vld [vmem:[#allocation2] sm:$0xff]
    %22 = vrot.lane.b32.xlu0 %v21, 1
    %v23 = vpop.permute.xlu0 %22
    %24 = vst [vmem:[#allocation5] sm:$0xff] %v23
    // Predicated region
    $region10: #{tpu_custom_call.1} parent=1 // pred_check
      _
    $region11: #{tpu_custom_call.1} parent=1 // pred_check_branch
      %26 = sbr.rel (0) target = $region13
    $region12: #{tpu_custom_call.1} parent=1 // pred_region
      %s28 = ssub.s32 128, 128
      %29 = vsyncadd [#allocation4], %s28
      %s31 = sshll.u32 [#allocation5], 4
      %s32 = int_to_ptr.vmem [resolvable:$true] %s31
      %34 = dma.vmem_to_hbm [thread:$0]  %s32, 128, %s1, [#allocation4]
    $region13: #{tpu_custom_call.1} parent=1 // pred_fallthru
      _
    // Predicated region
    $region14: #{tpu_custom_call.1} parent=1 // pred_check
      _
    $region15: #{tpu_custom_call.1} parent=1 // pred_check_branch
      %36 = sbr.rel (0) target = $region17
    $region16: #{tpu_custom_call.1} parent=1 // pred_region
      %37 = dma.done [#allocation4], 128
    $region17: #{tpu_custom_call.1} parent=1 // pred_fallthru
      _
    %38 = vsyncpa [#allocation3], 1
    %39 = vsyncpa [#allocation4], 1

</llo_original>
